<compile_context>
chip_gen: v5e
topology: v5e:2x2
jax: 0.10.0
libtpu: 0.0.40
codegen_flags: <defaults>
</compile_context>

<pallas_src>
import functools

import jax
import jax.numpy as jnp
from jax.experimental import pallas as pl
from jax.experimental.pallas import tpu as pltpu


def _channel_attention_kernel(n_total, x_ref, w1_ref, w2_ref, o_ref,
                              sum_acc, max_acc):
    n = pl.program_id(1)

    @pl.when(n == 0)
    def _():
        sum_acc[...] = jnp.zeros_like(sum_acc)
        max_acc[...] = jnp.full_like(max_acc, -jnp.inf)

    xv = x_ref[0].astype(jnp.float32)            # (C, TN)
    C, TN = xv.shape

    # Mask columns past the true spatial extent (last tile may be padded).
    col = jax.lax.broadcasted_iota(jnp.int32, (C, TN), 1) + n * TN
    valid = col < n_total

    sum_acc[...] += jnp.sum(jnp.where(valid, xv, 0.0), axis=-1, keepdims=True)
    max_acc[...] = jnp.maximum(
        max_acc[...],
        jnp.max(jnp.where(valid, xv, -jnp.inf), axis=-1, keepdims=True))

    @pl.when(n == pl.num_programs(1) - 1)
    def _():
        w1 = w1_ref[...].astype(jnp.float32)     # (Ch, C)
        w2 = w2_ref[...].astype(jnp.float32)     # (C, Ch)
        avg = sum_acc[...] * (1.0 / n_total)     # (C, 1)
        mx = max_acc[...]                        # (C, 1)

        def shared_mlp(p):                       # (C, 1) -> (C, 1), no transposes
            h = jnp.maximum(
                jnp.dot(w1, p, preferred_element_type=jnp.float32), 0.0)
            return jnp.dot(w2, h, preferred_element_type=jnp.float32)

        out = jax.nn.sigmoid(shared_mlp(avg) + shared_mlp(mx))
        o_ref[0] = out.astype(o_ref.dtype)


def channel_attention(x, fc1_weight, fc2_weight, *, tile_n=2048):
    """x: (B, C, H, W); fc1_weight: (C//16, C[,1,1]); fc2_weight: (C, C//16[,1,1]).

    Returns the channel attention map, shape (B, C, 1, 1) (same semantics as
    the PyTorch ChannelAttention.forward).
    """
    B, C, H, W = x.shape
    N = H * W
    w1 = fc1_weight.reshape(fc1_weight.shape[0], fc1_weight.shape[1])
    w2 = fc2_weight.reshape(fc2_weight.shape[0], fc2_weight.shape[1])
    Ch = w1.shape[0]
    assert w1.shape == (Ch, C) and w2.shape == (C, Ch)

    x_flat = x.reshape(B, C, N)
    TN = N if N <= tile_n else tile_n            # lane-dense spatial tiles
    grid_n = pl.cdiv(N, TN)

    out = pl.pallas_call(
        functools.partial(_channel_attention_kernel, N),
        out_shape=jax.ShapeDtypeStruct((B, C, 1), x.dtype),
        grid_spec=pltpu.PrefetchScalarGridSpec(
            num_scalar_prefetch=0,
            grid=(B, grid_n),
            in_specs=[
                pl.BlockSpec((1, C, TN), lambda b, n: (b, 0, n)),   # x
                pl.BlockSpec((Ch, C), lambda b, n: (0, 0)),         # fc1 weight
                pl.BlockSpec((C, Ch), lambda b, n: (0, 0)),         # fc2 weight
            ],
            out_specs=pl.BlockSpec((1, C, 1), lambda b, n: (b, 0, 0)),
            scratch_shapes=[
                pltpu.VMEM((C, 1), jnp.float32),   # running sum
                pltpu.VMEM((C, 1), jnp.float32),   # running max
            ],
        ),
        compiler_params=pltpu.CompilerParams(
            dimension_semantics=("parallel", "arbitrary")),
    )(x_flat, w1, w2)

    return out.reshape(B, C, 1, 1)


def _reference(x, fc1_weight, fc2_weight):
    B, C, H, W = x.shape
    w1 = fc1_weight.reshape(fc1_weight.shape[0], fc1_weight.shape[1]).astype(jnp.float32)
    w2 = fc2_weight.reshape(fc2_weight.shape[0], fc2_weight.shape[1]).astype(jnp.float32)
    xf = x.astype(jnp.float32).reshape(B, C, -1)
    avg = xf.mean(axis=-1)
    mx = xf.max(axis=-1)

    def mlp(p):
        return jnp.maximum(p @ w1.T, 0.0) @ w2.T

    out = jax.nn.sigmoid(mlp(avg) + mlp(mx))
    return out.reshape(B, C, 1, 1).astype(x.dtype)


if __name__ == "__main__":
    key = jax.random.PRNGKey(0)
    kx, k1, k2 = jax.random.split(key, 3)

    # C must be >= 16 because fc1 maps C -> C // 16 (as in the PyTorch module).
    B, C, H, W = 2, 64, 16, 16
    Ch = C // 16
    x = jax.random.normal(kx, (B, C, H, W), dtype=jnp.float32)
    fc1_w = jax.random.normal(k1, (Ch, C, 1, 1), dtype=jnp.float32) * 0.1
    fc2_w = jax.random.normal(k2, (C, Ch, 1, 1), dtype=jnp.float32) * 0.1

    out = channel_attention(x, fc1_w, fc2_w)
    out = jax.block_until_ready(out)

    ref = _reference(x, fc1_w, fc2_w)
    assert out.shape == (B, C, 1, 1)
    assert jnp.allclose(out, ref, atol=1e-5, rtol=1e-5)

    print("KERNEL_OK")
</pallas_src>

<mosaic_0001>
module attributes {stable_mosaic.version = 11 : i64} {
  func.func @_channel_attention_kernel(%arg0: i32, %arg1: i32, %arg2: memref<1x64x256xf32, #tpu.memory_space<vmem>>, %arg3: memref<4x64xf32, #tpu.memory_space<vmem>>, %arg4: memref<64x4xf32, #tpu.memory_space<vmem>>, %arg5: memref<1x64x1xf32, #tpu.memory_space<vmem>>, %arg6: memref<64x1xf32, #tpu.memory_space<vmem>>, %arg7: memref<64x1xf32, #tpu.memory_space<vmem>>) attributes {dimension_semantics = [#tpu.dimension_semantics<parallel>, #tpu.dimension_semantics<arbitrary>], iteration_bounds = array<i64: 2, 1>, scalar_prefetch = 0 : i64, scratch_operands = 2 : i64, tpu.core_type = #tpu.core_type<tc>, window_params = [{transform_indices = @transform_0, window_bounds = array<i64: 1, 64, 256>}, {pipeline_mode = #tpu.pipeline_mode<synchronous>, transform_indices = @transform_1, window_bounds = array<i64: 4, 64>}, {pipeline_mode = #tpu.pipeline_mode<synchronous>, transform_indices = @transform_2, window_bounds = array<i64: 64, 4>}, {transform_indices = @transform_3, window_bounds = array<i64: 1, 64, 1>}]} {
    %c0_i32 = arith.constant 0 : i32
    %0 = arith.cmpi eq, %arg1, %c0_i32 : i32
    %1 = arith.extui %0 : i1 to i32
    %c0_i32_0 = arith.constant 0 : i32
    %2 = arith.cmpi ne, %1, %c0_i32_0 : i32
    scf.if %2 {
      %cst_17 = arith.constant 0.000000e+00 : f32
      %28 = vector.broadcast %cst_17 : f32 to vector<64x1xf32>
      %c0_18 = arith.constant 0 : index
      %c0_19 = arith.constant 0 : index
      %29 = vector.load %arg6[%c0_18, %c0_19] : memref<64x1xf32, #tpu.memory_space<vmem>>, vector<64x1xf32>
      tpu.vector_store %arg6[%c0_18, %c0_19], %28 {strides = array<i32>} : memref<64x1xf32, #tpu.memory_space<vmem>>, vector<64x1xf32>,
      %cst_20 = arith.constant 0xFF800000 : f32
      %30 = vector.broadcast %cst_20 : f32 to vector<64x1xf32>
      %c0_21 = arith.constant 0 : index
      %c0_22 = arith.constant 0 : index
      %31 = vector.load %arg7[%c0_21, %c0_22] : memref<64x1xf32, #tpu.memory_space<vmem>>, vector<64x1xf32>
      tpu.vector_store %arg7[%c0_21, %c0_22], %30 {strides = array<i32>} : memref<64x1xf32, #tpu.memory_space<vmem>>, vector<64x1xf32>,
    } else {
    }
    %c0 = arith.constant 0 : index
    %c0_1 = arith.constant 0 : index
    %c0_2 = arith.constant 0 : index
    %3 = vector.load %arg2[%c0, %c0_1, %c0_2] : memref<1x64x256xf32, #tpu.memory_space<vmem>>, vector<1x64x256xf32>
    %4 = vector.shape_cast %3 : vector<1x64x256xf32> to vector<64x256xf32>
    %5 = tpu.iota {dimensions = array<i32: 1>} : vector<64x256xi32>
    %c256_i32 = arith.constant 256 : i32
    %6 = arith.muli %arg1, %c256_i32 : i32
    %7 = vector.broadcast %6 : i32 to vector<64x256xi32>
    %8 = arith.addi %5, %7 : vector<64x256xi32>
    %c256_i32_3 = arith.constant 256 : i32
    %9 = vector.broadcast %c256_i32_3 : i32 to vector<64x256xi32>
    %10 = arith.cmpi slt, %8, %9 : vector<64x256xi32>
    %c0_4 = arith.constant 0 : index
    %c0_5 = arith.constant 0 : index
    %11 = vector.load %arg6[%c0_4, %c0_5] : memref<64x1xf32, #tpu.memory_space<vmem>>, vector<64x1xf32>
    %cst = arith.constant 0.000000e+00 : f32
    %12 = vector.broadcast %cst : f32 to vector<64x256xf32>
    %13 = arith.select %10, %4, %12 : vector<64x256xi1>, vector<64x256xf32>
    %cst_6 = arith.constant dense<0.000000e+00> : vector<64xf32>
    %14 = vector.multi_reduction <add>, %13, %cst_6 [1] : vector<64x256xf32> to vector<64xf32>
    %15 = vector.shape_cast %14 : vector<64xf32> to vector<64x1xf32>
    %16 = arith.addf %11, %15 : vector<64x1xf32>
    %c0_7 = arith.constant 0 : index
    %c0_8 = arith.constant 0 : index
    %17 = vector.load %arg6[%c0_7, %c0_8] : memref<64x1xf32, #tpu.memory_space<vmem>>, vector<64x1xf32>
    tpu.vector_store %arg6[%c0_7, %c0_8], %16 {strides = array<i32>} : memref<64x1xf32, #tpu.memory_space<vmem>>, vector<64x1xf32>,
    %c0_9 = arith.constant 0 : index
    %c0_10 = arith.constant 0 : index
    %18 = vector.load %arg7[%c0_9, %c0_10] : memref<64x1xf32, #tpu.memory_space<vmem>>, vector<64x1xf32>
    %cst_11 = arith.constant 0xFF800000 : f32
    %19 = vector.broadcast %cst_11 : f32 to vector<64x256xf32>
    %20 = arith.select %10, %4, %19 : vector<64x256xi1>, vector<64x256xf32>
    %cst_12 = arith.constant dense<0xFF800000> : vector<64xf32>
    %21 = vector.multi_reduction <maximumf>, %20, %cst_12 [1] : vector<64x256xf32> to vector<64xf32>
    %22 = vector.shape_cast %21 : vector<64xf32> to vector<64x1xf32>
    %23 = arith.maximumf %18, %22 : vector<64x1xf32>
    %c0_13 = arith.constant 0 : index
    %c0_14 = arith.constant 0 : index
    %24 = vector.load %arg7[%c0_13, %c0_14] : memref<64x1xf32, #tpu.memory_space<vmem>>, vector<64x1xf32>
    tpu.vector_store %arg7[%c0_13, %c0_14], %23 {strides = array<i32>} : memref<64x1xf32, #tpu.memory_space<vmem>>, vector<64x1xf32>,
    %c0_i32_15 = arith.constant 0 : i32
    %25 = arith.cmpi eq, %arg1, %c0_i32_15 : i32
    %26 = arith.extui %25 : i1 to i32
    %c0_i32_16 = arith.constant 0 : i32
    %27 = arith.cmpi ne, %26, %c0_i32_16 : i32
    scf.if %27 {
      %c0_17 = arith.constant 0 : index
      %c0_18 = arith.constant 0 : index
      %28 = vector.load %arg3[%c0_17, %c0_18] : memref<4x64xf32, #tpu.memory_space<vmem>>, vector<4x64xf32>
      %c0_19 = arith.constant 0 : index
      %c0_20 = arith.constant 0 : index
      %29 = vector.load %arg4[%c0_19, %c0_20] : memref<64x4xf32, #tpu.memory_space<vmem>>, vector<64x4xf32>
      %c0_21 = arith.constant 0 : index
      %c0_22 = arith.constant 0 : index
      %30 = vector.load %arg6[%c0_21, %c0_22] : memref<64x1xf32, #tpu.memory_space<vmem>>, vector<64x1xf32>
      %cst_23 = arith.constant 3.906250e-03 : f32
      %31 = vector.broadcast %cst_23 : f32 to vector<64x1xf32>
      %32 = arith.mulf %30, %31 : vector<64x1xf32>
      %c0_24 = arith.constant 0 : index
      %c0_25 = arith.constant 0 : index
      %33 = vector.load %arg7[%c0_24, %c0_25] : memref<64x1xf32, #tpu.memory_space<vmem>>, vector<64x1xf32>
      %cst_26 = arith.constant dense<0.000000e+00> : vector<4x1xf32>
      %34 = tpu.matmul %28, %32, %cst_26 {dimension_numbers = #tpu.dot_dimension_numbers<[1], [0], [0], [1], [0, 0, 1, 1], [], []>} : vector<4x64xf32>, vector<64x1xf32>, vector<4x1xf32> -> vector<4x1xf32>
      %cst_27 = arith.constant 0.000000e+00 : f32
      %35 = vector.broadcast %cst_27 : f32 to vector<4x1xf32>
      %36 = arith.maximumf %34, %35 : vector<4x1xf32>
      %cst_28 = arith.constant dense<0.000000e+00> : vector<64x1xf32>
      %37 = tpu.matmul %29, %36, %cst_28 {dimension_numbers = #tpu.dot_dimension_numbers<[1], [0], [0], [1], [0, 0, 1, 1], [], []>} : vector<64x4xf32>, vector<4x1xf32>, vector<64x1xf32> -> vector<64x1xf32>
      %cst_29 = arith.constant dense<0.000000e+00> : vector<4x1xf32>
      %38 = tpu.matmul %28, %33, %cst_29 {dimension_numbers = #tpu.dot_dimension_numbers<[1], [0], [0], [1], [0, 0, 1, 1], [], []>} : vector<4x64xf32>, vector<64x1xf32>, vector<4x1xf32> -> vector<4x1xf32>
      %cst_30 = arith.constant 0.000000e+00 : f32
      %39 = vector.broadcast %cst_30 : f32 to vector<4x1xf32>
      %40 = arith.maximumf %38, %39 : vector<4x1xf32>
      %cst_31 = arith.constant dense<0.000000e+00> : vector<64x1xf32>
      %41 = tpu.matmul %29, %40, %cst_31 {dimension_numbers = #tpu.dot_dimension_numbers<[1], [0], [0], [1], [0, 0, 1, 1], [], []>} : vector<64x4xf32>, vector<4x1xf32>, vector<64x1xf32> -> vector<64x1xf32>
      %42 = arith.addf %37, %41 : vector<64x1xf32>
      %43 = arith.negf %42 : vector<64x1xf32>
      %44 = math.exp %43 : vector<64x1xf32>
      %cst_32 = arith.constant 1.000000e+00 : f32
      %45 = vector.broadcast %cst_32 : f32 to vector<64x1xf32>
      %46 = arith.addf %45, %44 : vector<64x1xf32>
      %47 = arith.divf %45, %46 : vector<64x1xf32>
      %c0_33 = arith.constant 0 : index
      %c0_34 = arith.constant 0 : index
      %c0_35 = arith.constant 0 : index
      %48 = vector.load %arg5[%c0_33, %c0_34, %c0_35] : memref<1x64x1xf32, #tpu.memory_space<vmem>>, vector<1x64x1xf32>
      %49 = vector.shape_cast %48 : vector<1x64x1xf32> to vector<64x1xf32>
      %50 = vector.shape_cast %47 : vector<64x1xf32> to vector<1x64x1xf32>
      tpu.vector_store %arg5[%c0_33, %c0_34, %c0_35], %50 {strides = array<i32>} : memref<1x64x1xf32, #tpu.memory_space<vmem>>, vector<1x64x1xf32>,
    } else {
    }
    return
  }
  func.func @transform_0(%arg0: i32, %arg1: i32) -> (i32, i32, i32) {
    %c0_i32 = arith.constant 0 : i32
    %c0_i32_0 = arith.constant 0 : i32
    return %arg0, %c0_i32, %arg1 : i32, i32, i32
  }
  func.func @transform_1(%arg0: i32, %arg1: i32) -> (i32, i32) {
    %c0_i32 = arith.constant 0 : i32
    %c0_i32_0 = arith.constant 0 : i32
    %c0_i32_1 = arith.constant 0 : i32
    return %c0_i32, %c0_i32_0 : i32, i32
  }
  func.func @transform_2(%arg0: i32, %arg1: i32) -> (i32, i32) {
    %c0_i32 = arith.constant 0 : i32
    %c0_i32_0 = arith.constant 0 : i32
    %c0_i32_1 = arith.constant 0 : i32
    return %c0_i32, %c0_i32_0 : i32, i32
  }
  func.func @transform_3(%arg0: i32, %arg1: i32) -> (i32, i32, i32) {
    %c0_i32 = arith.constant 0 : i32
    %c0_i32_0 = arith.constant 0 : i32
    %c0_i32_1 = arith.constant 0 : i32
    return %arg0, %c0_i32, %c0_i32_0 : i32, i32, i32
  }
}

</mosaic_0001>

<llo_original>
// kernel: tpu_custom_call.1
$region0: #{tpu_custom_call.1}
  #allocation0 [shape = 'u32[]', space=smem, size = 0x4, offset = 0x4, fixed_abs, tag = 'smem constant byte address 0x4 - core index']
  #allocation1 [shape = 'u32[72,128]{1,0:T(1,128)}', space=vmem, size = 0x9000, scoped, tag = 'internal scratch']
  #allocation2 [shape = 'f32[64,1]{1,0:T(8,128)}', space=vmem, size = 0x8000, scoped, tag = 'scratch operand']
  #allocation3 [shape = 'f32[64,1]{1,0:T(8,128)}', space=vmem, size = 0x8000, scoped, tag = 'scratch operand']
  %s0 = inlined_call_operand.hbm [shape: f32[2,64,256], index: 0, kind: input, shape index: {}]
  %s1 = inlined_call_operand.vmem [shape: f32[4,64], index: 1, kind: input, shape index: {}]
  %s2 = inlined_call_operand.vmem [shape: f32[64,4], index: 2, kind: input, shape index: {}]
  %s3 = inlined_call_operand.vmem [shape: f32[2,64,1], index: 3, kind: output, shape index: {}]
  %s4 = sld [smem:[#allocation0]]
  $region57: #{tpu_custom_call.1} parent=0
    _
  %s6 = ssub.s32 1, %s4
  %s7 = scalar_select 0, %s6, %s4
  $region1: #{tpu_custom_call.1} parent=0
    #allocation4 [shape = 'u8[131072]{0}', space=vmem, size = 0x20000, scoped, tag = 'input window, operand 0']
    #allocation5 [shape = 's32[2]{0}', space=sflag, size = 0x8, scoped, tag = 'scoped memory for tpu_custom_call.1']
    %8 = vsyncpa [#allocation5], 0
    %s9 = scalar_lea.sflag [#allocation5], 1
    %10 = vsyncpa %s9, 0
    loop: start=0, step=1, limit=4
    $region2: #{tpu_custom_call.1} parent=1 // loop_pre_header
      _
    $region3: #{tpu_custom_call.1} parent=1 // loop_header
      %s12 = sphi 0, %s16
      %p13 = scmp.ge.s32.totalorder %s12, 4
      %s19 = sphi 0, %s31
      %s20 = sphi 0, %s27
      %s21 = sphi 0, %s19
      %s22 = sphi 0, %s20
      %s23 = sphi 0, %s21
      %s24 = sphi 0, %s22
      %s36 = sphi 0, %s38
      %s39 = sphi 0, %s36
      %s40 = sphi 0, %s39
      %s56 = sphi 0, %s40
      %s60 = sphi 0, %s60
      %s62 = sphi 0, %s60
      %s63 = sphi 0, %s62
      %s77 = sphi 0, %s63
      %s81 = sphi 0, %s81
      %s83 = sphi 0, %s81
      %s84 = sphi 0, %s83
      %s98 = sphi 0, %s84
      %s104 = sphi 0, %s106
      %s107 = sphi 0, %s104
      %s108 = sphi 0, %s107
      %s124 = sphi 0, %s108
    $region4: #{tpu_custom_call.1} parent=1 // loop_header_branch
      %15 = sbr.rel (%p13) target = $region8
    $region5: #{tpu_custom_call.1} parent=1 // loop_body
      %s17 = ssub.s32 %s12, 1
      %s18 = ssub.s32 %s12, 2
      %s25 = sadd.s32 1, %s20
      %p26 = scmp.ge.s32.totalorder %s25, 1
      %s27 = scalar_select %p26, 0, %s25
      %s28 = sadd.s32 1, %s19
      %s29 = scalar_select %p26, %s28, %s19
      %p30 = scmp.ge.s32.totalorder %s29, 2
      %s31 = scalar_select %p30, 0, %s29
      %s32 = ssub.s32 %s19, %s31
      %s33 = ssub.s32 %s20, %s27
      %s34 = sor.u32 %s32, %s33
      %p35 = scmp.eq.s32.totalorder %s34, 0
      %s37 = sadd.s32 %s36, 1
      %s38 = scalar_select %p35, %s36, %s37
      %p41 = pneg %p35
      %p42 = scmp.eq.s32.totalorder %s12, 1
      %p43 = por %p41, %p42
      %p44 = scmp.ne.s32.totalorder %s36, %s39
      %p45 = scmp.eq.s32.totalorder %s12, 0
      %p46 = por %p44, %p45
      %p47 = scmp.ne.s32.totalorder %s36, %s39
      %p48 = scmp.eq.s32.totalorder %s17, 1
      %p49 = por %p47, %p48
      %p50 = scmp.ne.s32.totalorder %s39, %s40
      %p51 = scmp.eq.s32.totalorder %s17, 0
      %p52 = por %p50, %p51
      %p53 = scmp.ne.s32.totalorder %s39, %s40
      %p54 = scmp.eq.s32.totalorder %s18, 1
      %p55 = por %p53, %p54
      %p57 = scmp.ne.s32.totalorder %s40, %s56
      %p58 = scmp.eq.s32.totalorder %s18, 0
      %p59 = por %p57, %p58
      %s61 = sadd.s32 %s60, 1
      %p64 = scmp.eq.s32.totalorder %s12, 1
      %p65 = scmp.ne.s32.totalorder %s60, %s62
      %p66 = scmp.eq.s32.totalorder %s12, 0
      %p67 = por %p65, %p66
      %p68 = scmp.ne.s32.totalorder %s60, %s62
      %p69 = scmp.eq.s32.totalorder %s17, 1
      %p70 = por %p68, %p69
      %p71 = scmp.ne.s32.totalorder %s62, %s63
      %p72 = scmp.eq.s32.totalorder %s17, 0
      %p73 = por %p71, %p72
      %p74 = scmp.ne.s32.totalorder %s62, %s63
      %p75 = scmp.eq.s32.totalorder %s18, 1
      %p76 = por %p74, %p75
      %p78 = scmp.ne.s32.totalorder %s63, %s77
      %p79 = scmp.eq.s32.totalorder %s18, 0
      %p80 = por %p78, %p79
      %s82 = sadd.s32 %s81, 1
      %p85 = scmp.eq.s32.totalorder %s12, 1
      %p86 = scmp.ne.s32.totalorder %s81, %s83
      %p87 = scmp.eq.s32.totalorder %s12, 0
      %p88 = por %p86, %p87
      %p89 = scmp.ne.s32.totalorder %s81, %s83
      %p90 = scmp.eq.s32.totalorder %s17, 1
      %p91 = por %p89, %p90
      %p92 = scmp.ne.s32.totalorder %s83, %s84
      %p93 = scmp.eq.s32.totalorder %s17, 0
      %p94 = por %p92, %p93
      %p95 = scmp.ne.s32.totalorder %s83, %s84
      %p96 = scmp.eq.s32.totalorder %s18, 1
      %p97 = por %p95, %p96
      %p99 = scmp.ne.s32.totalorder %s84, %s98
      %p100 = scmp.eq.s32.totalorder %s18, 0
      %p101 = por %p99, %p100
      %s102 = ssub.s32 %s19, %s31
      %p103 = scmp.eq.s32.totalorder %s102, 0
      %s105 = sadd.s32 %s104, 1
      %s106 = scalar_select %p103, %s104, %s105
      %p109 = pneg %p103
      %p110 = scmp.eq.s32.totalorder %s12, 1
      %p111 = por %p109, %p110
      %p112 = scmp.ne.s32.totalorder %s104, %s107
      %p113 = scmp.eq.s32.totalorder %s12, 0
      %p114 = por %p112, %p113
      %p115 = scmp.ne.s32.totalorder %s104, %s107
      %p116 = scmp.eq.s32.totalorder %s17, 1
      %p117 = por %p115, %p116
      %p118 = scmp.ne.s32.totalorder %s107, %s108
      %p119 = scmp.eq.s32.totalorder %s17, 0
      %p120 = por %p118, %p119
      %p121 = scmp.ne.s32.totalorder %s107, %s108
      %p122 = scmp.eq.s32.totalorder %s18, 1
      %p123 = por %p121, %p122
      %p125 = scmp.ne.s32.totalorder %s108, %s124
      %p126 = scmp.eq.s32.totalorder %s18, 0
      %p127 = por %p125, %p126
      %p128 = scmp.le.s32.totalorder 1, %s12
      %p129 = scmp.lt.s32.totalorder %s12, 3
      %p130 = pnand %p128, %p129
      %p131 = pneg %p130
      // Predicated region
      $region9: #{tpu_custom_call.1} parent=5 // pred_check
        _
      $region10: #{tpu_custom_call.1} parent=5 // pred_check_branch
        %133 = sbr.rel (%p130) target = $region12
      $region11: #{tpu_custom_call.1} parent=5 // pred_region
        %s134 = ssub.s32 %s12, 1
        // Predicated region
        $region13: #{tpu_custom_call.1} parent=11 // pred_check
          %p135 = pneg %p73
        $region14: #{tpu_custom_call.1} parent=11 // pred_check_branch
          %137 = sbr.rel (%p135) target = $region16
        $region15: #{tpu_custom_call.1} parent=11 // pred_region
          _
        $region16: #{tpu_custom_call.1} parent=11 // pred_fallthru
          _
        // Predicated region
        $region17: #{tpu_custom_call.1} parent=11 // pred_check
          %p138 = pneg %p94
        $region18: #{tpu_custom_call.1} parent=11 // pred_check_branch
          %140 = sbr.rel (%p138) target = $region20
        $region19: #{tpu_custom_call.1} parent=11 // pred_region
          _
        $region20: #{tpu_custom_call.1} parent=11 // pred_fallthru
          _
      $region12: #{tpu_custom_call.1} parent=5 // pred_fallthru
        _
      %p141 = scmp.lt.s32.totalorder %s12, 2
      // Predicated region
      $region21: #{tpu_custom_call.1} parent=5 // pred_check
        %p142 = pneg %p141
      $region22: #{tpu_custom_call.1} parent=5 // pred_check_branch
        %144 = sbr.rel (%p142) target = $region24
      $region23: #{tpu_custom_call.1} parent=5 // pred_region
        // Predicated region
        $region25: #{tpu_custom_call.1} parent=23 // pred_check
          %p145 = pneg %p46
        $region26: #{tpu_custom_call.1} parent=23 // pred_check_branch
          %147 = sbr.rel (%p145) target = $region28
        $region27: #{tpu_custom_call.1} parent=23 // pred_region
          %s148 = sand.u32 %s36, 1
          %s149 = scalar_lea.sflag [#allocation5], %s148
          %s150 = sand.u32 %s36, 1
          %s151 = smul.addr %s150, 128
          %s152 = scalar_lea.vmem [#allocation4], %s151
          %s153 = smul.u32 2, %s20
          %155 = vsyncadd %s149, 0
          %s156 = smul.addr %s19, 16
          %s157 = sadd.s32 %s153, %s156
          %s158 = smul.addr %s157, 8
          %s159 = scalar_lea.hbm %s0, %s158
          %s160 = sshll.u32 %s159, 4
          %s161 = int_to_ptr.hbm [resolvable:$true] %s160
          %s162 = sshll.u32 %s152, 4
          %s163 = int_to_ptr.vmem [resolvable:$true] %s162
          %168 = dma.hbm_to_vmem [thread:$0]  %s161, 2048, %s163, %s149, 256, 256, 16
        $region28: #{tpu_custom_call.1} parent=23 // pred_fallthru
          _
      $region24: #{tpu_custom_call.1} parent=5 // pred_fallthru
        _
      %p169 = scmp.le.s32.totalorder 1, %s12
      %p170 = scmp.lt.s32.totalorder %s12, 3
      %p171 = pnand %p169, %p170
      %p172 = pneg %p171
      // Predicated region
      $region29: #{tpu_custom_call.1} parent=5 // pred_check
        _
      $region30: #{tpu_custom_call.1} parent=5 // pred_check_branch
        %174 = sbr.rel (%p171) target = $region32
      $region31: #{tpu_custom_call.1} parent=5 // pred_region
        %s175 = ssub.s32 %s12, 1
        %s176 = sand.u32 %s39, 1
        %s177 = scalar_lea.sflag [#allocation5], %s176
        %s178 = sand.u32 %s39, 1
        %s179 = smul.addr %s178, 128
        %s180 = scalar_lea.vmem [#allocation4], %s179
        // Predicated region
        $region33: #{tpu_custom_call.1} parent=31 // pred_check
          %p181 = pneg %p52
        $region34: #{tpu_custom_call.1} parent=31 // pred_check_branch
          %183 = sbr.rel (%p181) target = $region36
        $region35: #{tpu_custom_call.1} parent=31 // pred_region
          %185 = dma.done %s177, 2048
        $region36: #{tpu_custom_call.1} parent=31 // pred_fallthru
          _
        %s186 = sand.u32 %s39, 1
        %s187 = scalar_lea.sflag [#allocation5], %s186
        %s188 = sand.u32 %s39, 1
        %s189 = smul.addr %s188, 128
        %s190 = scalar_lea.vmem [#allocation4], %s189
        %p191 = pneg %p52
        %p192 = pneg %p49
        %p193 = pneg %p73
        %p194 = pneg %p70
        %p195 = pneg %p94
        %p196 = pneg %p91
        %p197 = pneg %p120
        %p198 = pneg %p117
        %p199 = scmp.lt.s32.totalorder %s21, 1
        %s200 = scalar_select %p199, %s21, 1
        %s201 = smul.addr %s200, 8
        %s202 = smul.addr %s201, 8
        %s203 = scalar_lea.vmem %s3, %s202
        %s204 = smul.u32 2, %s22
        %p205 = scmp.lt.s32.totalorder %s21, 1
        %s206 = scalar_select %p205, %s21, 1
        %s207 = smul.addr %s206, 8
        %s208 = smul.addr %s207, 8
        %s209 = scalar_lea.vmem %s3, %s208
        %p210 = scmp.eq.s32.totalorder %s22, 0
        // Predicated region
        $region37: #{tpu_custom_call.1} parent=31 // pred_check
          %p211 = pneg %p210
        $region38: #{tpu_custom_call.1} parent=31 // pred_check_branch
          %213 = sbr.rel (%p211) target = $region40
        $region39: #{tpu_custom_call.1} parent=31 // pred_region
          %vm214 = vcmask 7168
          %215 = vst.msk [vmem:[#allocation2] sm:$0xff] %vm214, 0.0
          %216 = vst.msk [vmem:[#allocation2 + $0x8] sm:$0xff] %vm214, 0.0
          %217 = vst.msk [vmem:[#allocation2 + $0x10] sm:$0xff] %vm214, 0.0
          %218 = vst.msk [vmem:[#allocation2 + $0x18] sm:$0xff] %vm214, 0.0
          %219 = vst.msk [vmem:[#allocation2 + $0x20] sm:$0xff] %vm214, 0.0
          %220 = vst.msk [vmem:[#allocation2 + $0x28] sm:$0xff] %vm214, 0.0
          %221 = vst.msk [vmem:[#allocation2 + $0x30] sm:$0xff] %vm214, 0.0
          %222 = vst.msk [vmem:[#allocation2 + $0x38] sm:$0xff] %vm214, 0.0
          %223 = vst.msk [vmem:[#allocation3] sm:$0xff] %vm214, -inf
          %224 = vst.msk [vmem:[#allocation3 + $0x8] sm:$0xff] %vm214, -inf
          %225 = vst.msk [vmem:[#allocation3 + $0x10] sm:$0xff] %vm214, -inf
          %226 = vst.msk [vmem:[#allocation3 + $0x18] sm:$0xff] %vm214, -inf
          %227 = vst.msk [vmem:[#allocation3 + $0x20] sm:$0xff] %vm214, -inf
          %228 = vst.msk [vmem:[#allocation3 + $0x28] sm:$0xff] %vm214, -inf
          %229 = vst.msk [vmem:[#allocation3 + $0x30] sm:$0xff] %vm214, -inf
          %230 = vst.msk [vmem:[#allocation3 + $0x38] sm:$0xff] %vm214, -inf
        $region40: #{tpu_custom_call.1} parent=31 // pred_fallthru
          _
        %v231 = vld [vmem:[%s180] sm:$0xff]
        %v232 = vld [vmem:[%s180 + $0x8] sm:$0xff]
        %v233 = vld [vmem:[%s180 + $0x10] sm:$0xff]
        %v234 = vld [vmem:[%s180 + $0x18] sm:$0xff]
        %v235 = vld [vmem:[%s180 + $0x20] sm:$0xff]
        %v236 = vld [vmem:[%s180 + $0x28] sm:$0xff]
        %v237 = vld [vmem:[%s180 + $0x30] sm:$0xff]
        %v238 = vld [vmem:[%s180 + $0x38] sm:$0xff]
        %v239 = vld [vmem:[%s180 + $0x40] sm:$0xff]
        %v240 = vld [vmem:[%s180 + $0x48] sm:$0xff]
        %v241 = vld [vmem:[%s180 + $0x50] sm:$0xff]
        %v242 = vld [vmem:[%s180 + $0x58] sm:$0xff]
        %v243 = vld [vmem:[%s180 + $0x60] sm:$0xff]
        %v244 = vld [vmem:[%s180 + $0x68] sm:$0xff]
        %v245 = vld [vmem:[%s180 + $0x70] sm:$0xff]
        %v246 = vld [vmem:[%s180 + $0x78] sm:$0xff]
        %v247 = vlaneseq
        %v248 = vand.u32 %v247, 127
        %v249 = vadd.s32 %v248, 128
        %s250 = smul.u32 %s22, 256
        %v251 = vstv %s250
        %v252 = vadd.s32 %v248, %v251
        %v253 = vadd.s32 %v249, %v251
        %vm254 = vcmp.lt.s32.totalorder %v252, 256
        %vm255 = vcmp.lt.s32.totalorder %v253, 256
        %v256 = vld [vmem:[#allocation2] sm:$0xff]
        %v257 = vld [vmem:[#allocation2 + $0x8] sm:$0xff]
        %v258 = vld [vmem:[#allocation2 + $0x10] sm:$0xff]
        %v259 = vld [vmem:[#allocation2 + $0x18] sm:$0xff]
        %v260 = vld [vmem:[#allocation2 + $0x20] sm:$0xff]
        %v261 = vld [vmem:[#allocation2 + $0x28] sm:$0xff]
        %v262 = vld [vmem:[#allocation2 + $0x30] sm:$0xff]
        %v263 = vld [vmem:[#allocation2 + $0x38] sm:$0xff]
        %v264 = vsel %vm254, %v231, 0.0
        %v265 = vsel %vm255, %v232, 0.0
        %v266 = vsel %vm254, %v233, 0.0
        %v267 = vsel %vm255, %v234, 0.0
        %v268 = vsel %vm254, %v235, 0.0
        %v269 = vsel %vm255, %v236, 0.0
        %v270 = vsel %vm254, %v237, 0.0
        %v271 = vsel %vm255, %v238, 0.0
        %v272 = vsel %vm254, %v239, 0.0
        %v273 = vsel %vm255, %v240, 0.0
        %v274 = vsel %vm254, %v241, 0.0
        %v275 = vsel %vm255, %v242, 0.0
        %v276 = vsel %vm254, %v243, 0.0
        %v277 = vsel %vm255, %v244, 0.0
        %v278 = vsel %vm254, %v245, 0.0
        %v279 = vsel %vm255, %v246, 0.0
        %v280 = vadd.f32 %v264, %v265
        %281 = vadd.xlane.f32.xlu0 %v280
        %v282 = vpop.xlane.xlu0 %281
        %v283 = vadd.f32 %v266, %v267
        %284 = vadd.xlane.f32.xlu0 %v283
        %v285 = vpop.xlane.xlu0 %284
        %v286 = vadd.f32 %v268, %v269
        %287 = vadd.xlane.f32.xlu0 %v286
        %v288 = vpop.xlane.xlu0 %287
        %v289 = vadd.f32 %v270, %v271
        %290 = vadd.xlane.f32.xlu0 %v289
        %v291 = vpop.xlane.xlu0 %290
        %v292 = vadd.f32 %v272, %v273
        %293 = vadd.xlane.f32.xlu0 %v292
        %v294 = vpop.xlane.xlu0 %293
        %v295 = vadd.f32 %v274, %v275
        %296 = vadd.xlane.f32.xlu0 %v295
        %v297 = vpop.xlane.xlu0 %296
        %v298 = vadd.f32 %v276, %v277
        %299 = vadd.xlane.f32.xlu0 %v298
        %v300 = vpop.xlane.xlu0 %299
        %v301 = vadd.f32 %v278, %v279
        %302 = vadd.xlane.f32.xlu0 %v301
        %v303 = vpop.xlane.xlu0 %302
        %v304 = vadd.f32 %v256, %v282
        %v305 = vadd.f32 %v257, %v285
        %v306 = vadd.f32 %v258, %v288
        %v307 = vadd.f32 %v259, %v291
        %v308 = vadd.f32 %v260, %v294
        %v309 = vadd.f32 %v261, %v297
        %v310 = vadd.f32 %v262, %v300
        %v311 = vadd.f32 %v263, %v303
        %vm312 = vcmask 7168
        %313 = vst.msk [vmem:[#allocation2] sm:$0xff] %vm312, %v304
        %314 = vst.msk [vmem:[#allocation2 + $0x8] sm:$0xff] %vm312, %v305
        %315 = vst.msk [vmem:[#allocation2 + $0x10] sm:$0xff] %vm312, %v306
        %316 = vst.msk [vmem:[#allocation2 + $0x18] sm:$0xff] %vm312, %v307
        %317 = vst.msk [vmem:[#allocation2 + $0x20] sm:$0xff] %vm312, %v308
        %318 = vst.msk [vmem:[#allocation2 + $0x28] sm:$0xff] %vm312, %v309
        %319 = vst.msk [vmem:[#allocation2 + $0x30] sm:$0xff] %vm312, %v310
        %320 = vst.msk [vmem:[#allocation2 + $0x38] sm:$0xff] %vm312, %v311
        %v321 = vld [vmem:[#allocation3] sm:$0xff]
        %v322 = vld [vmem:[#allocation3 + $0x8] sm:$0xff]
        %v323 = vld [vmem:[#allocation3 + $0x10] sm:$0xff]
        %v324 = vld [vmem:[#allocation3 + $0x18] sm:$0xff]
        %v325 = vld [vmem:[#allocation3 + $0x20] sm:$0xff]
        %v326 = vld [vmem:[#allocation3 + $0x28] sm:$0xff]
        %v327 = vld [vmem:[#allocation3 + $0x30] sm:$0xff]
        %v328 = vld [vmem:[#allocation3 + $0x38] sm:$0xff]
        %v329 = vsel %vm254, %v231, -inf
        %v330 = vsel %vm255, %v232, -inf
        %v331 = vsel %vm254, %v233, -inf
        %v332 = vsel %vm255, %v234, -inf
        %v333 = vsel %vm254, %v235, -inf
        %v334 = vsel %vm255, %v236, -inf
        %v335 = vsel %vm254, %v237, -inf
        %v336 = vsel %vm255, %v238, -inf
        %v337 = vsel %vm254, %v239, -inf
        %v338 = vsel %vm255, %v240, -inf
        %v339 = vsel %vm254, %v241, -inf
        %v340 = vsel %vm255, %v242, -inf
        %v341 = vsel %vm254, %v243, -inf
        %v342 = vsel %vm255, %v244, -inf
        %v343 = vsel %vm254, %v245, -inf
        %v344 = vsel %vm255, %v246, -inf
        %v345 = vmax.f32 %v329, %v330
        %346 = vmax.xlane.f32.xlu0 %v345
        %v347 = vpop.xlane.xlu0 %346
        %v348 = vmax.f32 %v331, %v332
        %349 = vmax.xlane.f32.xlu0 %v348
        %v350 = vpop.xlane.xlu0 %349
        %v351 = vmax.f32 %v333, %v334
        %352 = vmax.xlane.f32.xlu0 %v351
        %v353 = vpop.xlane.xlu0 %352
        %v354 = vmax.f32 %v335, %v336
        %355 = vmax.xlane.f32.xlu0 %v354
        %v356 = vpop.xlane.xlu0 %355
        %v357 = vmax.f32 %v337, %v338
        %358 = vmax.xlane.f32.xlu0 %v357
        %v359 = vpop.xlane.xlu0 %358
        %v360 = vmax.f32 %v339, %v340
        %361 = vmax.xlane.f32.xlu0 %v360
        %v362 = vpop.xlane.xlu0 %361
        %v363 = vmax.f32 %v341, %v342
        %364 = vmax.xlane.f32.xlu0 %v363
        %v365 = vpop.xlane.xlu0 %364
        %v366 = vmax.f32 %v343, %v344
        %367 = vmax.xlane.f32.xlu0 %v366
        %v368 = vpop.xlane.xlu0 %367
        %v369 = vmax.f32 %v321, %v347
        %v370 = vmax.f32 %v322, %v350
        %v371 = vmax.f32 %v323, %v353
        %v372 = vmax.f32 %v324, %v356
        %v373 = vmax.f32 %v325, %v359
        %v374 = vmax.f32 %v326, %v362
        %v375 = vmax.f32 %v327, %v365
        %v376 = vmax.f32 %v328, %v368
        %377 = vst.msk [vmem:[#allocation3] sm:$0xff] %vm312, %v369
        %378 = vst.msk [vmem:[#allocation3 + $0x8] sm:$0xff] %vm312, %v370
        %379 = vst.msk [vmem:[#allocation3 + $0x10] sm:$0xff] %vm312, %v371
        %380 = vst.msk [vmem:[#allocation3 + $0x18] sm:$0xff] %vm312, %v372
        %381 = vst.msk [vmem:[#allocation3 + $0x20] sm:$0xff] %vm312, %v373
        %382 = vst.msk [vmem:[#allocation3 + $0x28] sm:$0xff] %vm312, %v374
        %383 = vst.msk [vmem:[#allocation3 + $0x30] sm:$0xff] %vm312, %v375
        %384 = vst.msk [vmem:[#allocation3 + $0x38] sm:$0xff] %vm312, %v376
        // Predicated region
        $region41: #{tpu_custom_call.1} parent=31 // pred_check
          %p385 = pneg %p210
        $region42: #{tpu_custom_call.1} parent=31 // pred_check_branch
          %387 = sbr.rel (%p385) target = $region44
        $region43: #{tpu_custom_call.1} parent=31 // pred_region
          %v388 = vld [vmem:[%s1] sm:$0xf]
          %v389 = vld [vmem:[%s2] sm:$0xff]
          %v390 = vld [vmem:[%s2 + $0x8] sm:$0xff]
          %v391 = vld [vmem:[%s2 + $0x10] sm:$0xff]
          %v392 = vld [vmem:[%s2 + $0x18] sm:$0xff]
          %v393 = vld [vmem:[%s2 + $0x20] sm:$0xff]
          %v394 = vld [vmem:[%s2 + $0x28] sm:$0xff]
          %v395 = vld [vmem:[%s2 + $0x30] sm:$0xff]
          %v396 = vld [vmem:[%s2 + $0x38] sm:$0xff]
          %v397 = vld [vmem:[#allocation2] sm:$0xff]
          %v398 = vld [vmem:[#allocation2 + $0x8] sm:$0xff]
          %v399 = vld [vmem:[#allocation2 + $0x10] sm:$0xff]
          %v400 = vld [vmem:[#allocation2 + $0x18] sm:$0xff]
          %v401 = vld [vmem:[#allocation2 + $0x20] sm:$0xff]
          %v402 = vld [vmem:[#allocation2 + $0x28] sm:$0xff]
          %v403 = vld [vmem:[#allocation2 + $0x30] sm:$0xff]
          %v404 = vld [vmem:[#allocation2 + $0x38] sm:$0xff]
          %v405 = vmul.f32 %v397, 0.00390625
          %v406 = vmul.f32 %v398, 0.00390625
          %v407 = vmul.f32 %v399, 0.00390625
          %v408 = vmul.f32 %v400, 0.00390625
          %v409 = vmul.f32 %v401, 0.00390625
          %v410 = vmul.f32 %v402, 0.00390625
          %v411 = vmul.f32 %v403, 0.00390625
          %v412 = vmul.f32 %v404, 0.00390625
          %v413 = vld [vmem:[#allocation3] sm:$0xff]
          %v414 = vld [vmem:[#allocation3 + $0x8] sm:$0xff]
          %v415 = vld [vmem:[#allocation3 + $0x10] sm:$0xff]
          %v416 = vld [vmem:[#allocation3 + $0x18] sm:$0xff]
          %v417 = vld [vmem:[#allocation3 + $0x20] sm:$0xff]
          %v418 = vld [vmem:[#allocation3 + $0x28] sm:$0xff]
          %v419 = vld [vmem:[#allocation3 + $0x30] sm:$0xff]
          %v420 = vld [vmem:[#allocation3 + $0x38] sm:$0xff]
          %vm421 = vcmask 523264
          %v423 = vsel %vm421, %v388, 0
          %425 = vmatpush.msra.mxu0 0.0
          %426 = vmatpush.msra.mxu0 0.0
          %427 = vmatpush.msra.mxu0 0.0
          %428 = vmatpush.msra.mxu0 0.0
          %429 = vmatpush.msra.mxu0 0.0
          %430 = vmatpush.msra.mxu0 0.0
          %431 = vmatpush.msra.mxu0 0.0
          %432 = vmatpush.msra.mxu0 0.0
          %433 = vmatpush.msra.mxu0 %v412
          %434 = vmatpush.msra.mxu0 %v411
          %435 = vmatpush.msra.mxu0 %v410
          %436 = vmatpush.msra.mxu0 %v409
          %437 = vmatpush.msra.mxu0 %v408
          %438 = vmatpush.msra.mxu0 %v407
          %439 = vmatpush.msra.mxu0 %v406
          %440 = vmatpush.msra.mxu0 %v405
          %441 = vmatmul.f32.gmra.mxu0 %v423
          %v442 = vpop.f32.mrf.mxu0
          %v443 = vadd.f32 0.0, %v442
          %444 = vdwg.mxu0
          %v445 = vmax.f32 %v443, 0.0
          %446 = vmatpush.msra.mxu0 0.0
          %447 = vmatpush.msra.mxu0 0.0
          %448 = vmatpush.msra.mxu0 0.0
          %449 = vmatpush.msra.mxu0 0.0
          %450 = vmatpush.msra.mxu0 0.0
          %451 = vmatpush.msra.mxu0 0.0
          %452 = vmatpush.msra.mxu0 0.0
          %453 = vmatpush.msra.mxu0 0.0
          %454 = vmatpush.msra.mxu0 %v420
          %455 = vmatpush.msra.mxu0 %v419
          %456 = vmatpush.msra.mxu0 %v418
          %457 = vmatpush.msra.mxu0 %v417
          %458 = vmatpush.msra.mxu0 %v416
          %459 = vmatpush.msra.mxu0 %v415
          %460 = vmatpush.msra.mxu0 %v414
          %461 = vmatpush.msra.mxu0 %v413
          %462 = vmatmul.f32.gmra.mxu0 %v423
          %v463 = vpop.f32.mrf.mxu0
          %v464 = vadd.f32 0.0, %v463
          %465 = vdwg.mxu0
          %v466 = vmax.f32 %v464, 0.0
          %vm467 = vcmask 31744
          %v469 = vsel %vm467, %v389, 0
          %v472 = vsel %vm467, %v390, 0
          %v475 = vsel %vm467, %v391, 0
          %v478 = vsel %vm467, %v392, 0
          %v481 = vsel %vm467, %v393, 0
          %v484 = vsel %vm467, %v394, 0
          %v487 = vsel %vm467, %v395, 0
          %v490 = vsel %vm467, %v396, 0
          %vm492 = vcmask 1043456
          %v494 = vsel %vm492, %v466, 0
          %496 = vmatpush.msra.mxu0 0.0
          %497 = vmatpush.msra.mxu0 0.0
          %498 = vmatpush.msra.mxu0 0.0
          %499 = vmatpush.msra.mxu0 0.0
          %500 = vmatpush.msra.mxu0 0.0
          %501 = vmatpush.msra.mxu0 0.0
          %502 = vmatpush.msra.mxu0 0.0
          %503 = vmatpush.msra.mxu0 0.0
          %504 = vmatpush.msra.mxu0 0.0
          %505 = vmatpush.msra.mxu0 0.0
          %506 = vmatpush.msra.mxu0 0.0
          %507 = vmatpush.msra.mxu0 0.0
          %508 = vmatpush.msra.mxu0 0.0
          %509 = vmatpush.msra.mxu0 0.0
          %510 = vmatpush.msra.mxu0 0.0
          %511 = vmatpush.msra.mxu0 %v494
          %512 = vmatmul.f32.gmra.mxu0 %v469
          %v513 = vpop.f32.mrf.mxu0
          %v514 = vadd.f32 0.0, %v513
          %515 = vmatmul.f32.gmra.mxu0 %v472
          %v516 = vpop.f32.mrf.mxu0
          %v517 = vadd.f32 0.0, %v516
          %518 = vmatmul.f32.gmra.mxu0 %v475
          %v519 = vpop.f32.mrf.mxu0
          %v520 = vadd.f32 0.0, %v519
          %521 = vmatmul.f32.gmra.mxu0 %v478
          %v522 = vpop.f32.mrf.mxu0
          %v523 = vadd.f32 0.0, %v522
          %524 = vmatmul.f32.gmra.mxu0 %v481
          %v525 = vpop.f32.mrf.mxu0
          %v526 = vadd.f32 0.0, %v525
          %527 = vmatmul.f32.gmra.mxu0 %v484
          %v528 = vpop.f32.mrf.mxu0
          %v529 = vadd.f32 0.0, %v528
          %530 = vmatmul.f32.gmra.mxu0 %v487
          %v531 = vpop.f32.mrf.mxu0
          %v532 = vadd.f32 0.0, %v531
          %533 = vmatmul.f32.gmra.mxu0 %v490
          %v534 = vpop.f32.mrf.mxu0
          %v535 = vadd.f32 0.0, %v534
          %536 = vdwg.mxu0
          %v538 = vsel %vm492, %v445, 0
          %540 = vmatpush.msra.mxu0 0.0
          %541 = vmatpush.msra.mxu0 0.0
          %542 = vmatpush.msra.mxu0 0.0
          %543 = vmatpush.msra.mxu0 0.0
          %544 = vmatpush.msra.mxu0 0.0
          %545 = vmatpush.msra.mxu0 0.0
          %546 = vmatpush.msra.mxu0 0.0
          %547 = vmatpush.msra.mxu0 0.0
          %548 = vmatpush.msra.mxu0 0.0
          %549 = vmatpush.msra.mxu0 0.0
          %550 = vmatpush.msra.mxu0 0.0
          %551 = vmatpush.msra.mxu0 0.0
          %552 = vmatpush.msra.mxu0 0.0
          %553 = vmatpush.msra.mxu0 0.0
          %554 = vmatpush.msra.mxu0 0.0
          %555 = vmatpush.msra.mxu0 %v538
          %556 = vmatmul.f32.gmra.mxu0 %v469
          %v557 = vpop.f32.mrf.mxu0
          %v558 = vadd.f32 %v514, %v557
          %559 = vmatmul.f32.gmra.mxu0 %v472
          %v560 = vpop.f32.mrf.mxu0
          %v561 = vadd.f32 %v517, %v560
          %562 = vmatmul.f32.gmra.mxu0 %v475
          %v563 = vpop.f32.mrf.mxu0
          %v564 = vadd.f32 %v520, %v563
          %565 = vmatmul.f32.gmra.mxu0 %v478
          %v566 = vpop.f32.mrf.mxu0
          %v567 = vadd.f32 %v523, %v566
          %568 = vmatmul.f32.gmra.mxu0 %v481
          %v569 = vpop.f32.mrf.mxu0
          %v570 = vadd.f32 %v526, %v569
          %571 = vmatmul.f32.gmra.mxu0 %v484
          %v572 = vpop.f32.mrf.mxu0
          %v573 = vadd.f32 %v529, %v572
          %574 = vmatmul.f32.gmra.mxu0 %v487
          %v575 = vpop.f32.mrf.mxu0
          %v576 = vadd.f32 %v532, %v575
          %577 = vmatmul.f32.gmra.mxu0 %v490
          %v578 = vpop.f32.mrf.mxu0
          %v579 = vadd.f32 %v535, %v578
          %580 = vdwg.mxu0
          %v581 = vxor.u32 %v558, 2147483648
          %v582 = vxor.u32 %v561, 2147483648
          %v583 = vxor.u32 %v564, 2147483648
          %v584 = vxor.u32 %v567, 2147483648
          %v585 = vxor.u32 %v570, 2147483648
          %v586 = vxor.u32 %v573, 2147483648
          %v587 = vxor.u32 %v576, 2147483648
          %v588 = vxor.u32 %v579, 2147483648
          %v589 = vmul.f32 %v581, 1.442695
          %v590 = vpow.pop %v589
          %v591 = vmul.f32 %v582, 1.442695
          %v592 = vpow.pop %v591
          %v593 = vmul.f32 %v583, 1.442695
          %v594 = vpow.pop %v593
          %v595 = vmul.f32 %v584, 1.442695
          %v596 = vpow.pop %v595
          %v597 = vmul.f32 %v585, 1.442695
          %v598 = vpow.pop %v597
          %v599 = vmul.f32 %v586, 1.442695
          %v600 = vpow.pop %v599
          %v601 = vmul.f32 %v587, 1.442695
          %v602 = vpow.pop %v601
          %v603 = vmul.f32 %v588, 1.442695
          %v604 = vpow.pop %v603
          %v605 = vadd.f32 %v590, 1.0
          %v606 = vadd.f32 %v592, 1.0
          %v607 = vadd.f32 %v594, 1.0
          %v608 = vadd.f32 %v596, 1.0
          %v609 = vadd.f32 %v598, 1.0
          %v610 = vadd.f32 %v600, 1.0
          %v611 = vadd.f32 %v602, 1.0
          %v612 = vadd.f32 %v604, 1.0
          %v613 = vrcp.pop %v605
          %v614 = vmul.f32 %v605, %v613
          %v615 = vsub.f32 1.0, %v614
          %v616 = vmul.f32 %v613, %v615
          %v617 = vadd.f32 %v613, %v616
          %vm618 = vweird.f32 %v605
          %vm619 = vweird.f32 %v613
          %vm620 = vmor %vm618, %vm619
          %v621 = vsel %vm620, %v613, %v617
          %v622 = vand.u32 2147483647, %v605
          %vm623 = vcmp.eq.f32.partialorder %v622, 8.507059e+37
          %v624 = vand.u32 %v605, 2147483648
          %v625 = vor.u32 1.1754944e-38, %v624
          %v626 = vsel %vm623, %v625, %v621
          %v627 = vmul.f32 1.0, %v626
          %v628 = vrcp.pop %v606
          %v629 = vmul.f32 %v606, %v628
          %v630 = vsub.f32 1.0, %v629
          %v631 = vmul.f32 %v628, %v630
          %v632 = vadd.f32 %v628, %v631
          %vm633 = vweird.f32 %v606
          %vm634 = vweird.f32 %v628
          %vm635 = vmor %vm633, %vm634
          %v636 = vsel %vm635, %v628, %v632
          %v637 = vand.u32 2147483647, %v606
          %vm638 = vcmp.eq.f32.partialorder %v637, 8.507059e+37
          %v639 = vand.u32 %v606, 2147483648
          %v640 = vor.u32 1.1754944e-38, %v639
          %v641 = vsel %vm638, %v640, %v636
          %v642 = vmul.f32 1.0, %v641
          %v643 = vrcp.pop %v607
          %v644 = vmul.f32 %v607, %v643
          %v645 = vsub.f32 1.0, %v644
          %v646 = vmul.f32 %v643, %v645
          %v647 = vadd.f32 %v643, %v646
          %vm648 = vweird.f32 %v607
          %vm649 = vweird.f32 %v643
          %vm650 = vmor %vm648, %vm649
          %v651 = vsel %vm650, %v643, %v647
          %v652 = vand.u32 2147483647, %v607
          %vm653 = vcmp.eq.f32.partialorder %v652, 8.507059e+37
          %v654 = vand.u32 %v607, 2147483648
          %v655 = vor.u32 1.1754944e-38, %v654
          %v656 = vsel %vm653, %v655, %v651
          %v657 = vmul.f32 1.0, %v656
          %v658 = vrcp.pop %v608
          %v659 = vmul.f32 %v608, %v658
          %v660 = vsub.f32 1.0, %v659
          %v661 = vmul.f32 %v658, %v660
          %v662 = vadd.f32 %v658, %v661
          %vm663 = vweird.f32 %v608
          %vm664 = vweird.f32 %v658
          %vm665 = vmor %vm663, %vm664
          %v666 = vsel %vm665, %v658, %v662
          %v667 = vand.u32 2147483647, %v608
          %vm668 = vcmp.eq.f32.partialorder %v667, 8.507059e+37
          %v669 = vand.u32 %v608, 2147483648
          %v670 = vor.u32 1.1754944e-38, %v669
          %v671 = vsel %vm668, %v670, %v666
          %v672 = vmul.f32 1.0, %v671
          %v673 = vrcp.pop %v609
          %v674 = vmul.f32 %v609, %v673
          %v675 = vsub.f32 1.0, %v674
          %v676 = vmul.f32 %v673, %v675
          %v677 = vadd.f32 %v673, %v676
          %vm678 = vweird.f32 %v609
          %vm679 = vweird.f32 %v673
          %vm680 = vmor %vm678, %vm679
          %v681 = vsel %vm680, %v673, %v677
          %v682 = vand.u32 2147483647, %v609
          %vm683 = vcmp.eq.f32.partialorder %v682, 8.507059e+37
          %v684 = vand.u32 %v609, 2147483648
          %v685 = vor.u32 1.1754944e-38, %v684
          %v686 = vsel %vm683, %v685, %v681
          %v687 = vmul.f32 1.0, %v686
          %v688 = vrcp.pop %v610
          %v689 = vmul.f32 %v610, %v688
          %v690 = vsub.f32 1.0, %v689
          %v691 = vmul.f32 %v688, %v690
          %v692 = vadd.f32 %v688, %v691
          %vm693 = vweird.f32 %v610
          %vm694 = vweird.f32 %v688
          %vm695 = vmor %vm693, %vm694
          %v696 = vsel %vm695, %v688, %v692
          %v697 = vand.u32 2147483647, %v610
          %vm698 = vcmp.eq.f32.partialorder %v697, 8.507059e+37
          %v699 = vand.u32 %v610, 2147483648
          %v700 = vor.u32 1.1754944e-38, %v699
          %v701 = vsel %vm698, %v700, %v696
          %v702 = vmul.f32 1.0, %v701
          %v703 = vrcp.pop %v611
          %v704 = vmul.f32 %v611, %v703
          %v705 = vsub.f32 1.0, %v704
          %v706 = vmul.f32 %v703, %v705
          %v707 = vadd.f32 %v703, %v706
          %vm708 = vweird.f32 %v611
          %vm709 = vweird.f32 %v703
          %vm710 = vmor %vm708, %vm709
          %v711 = vsel %vm710, %v703, %v707
          %v712 = vand.u32 2147483647, %v611
          %vm713 = vcmp.eq.f32.partialorder %v712, 8.507059e+37
          %v714 = vand.u32 %v611, 2147483648
          %v715 = vor.u32 1.1754944e-38, %v714
          %v716 = vsel %vm713, %v715, %v711
          %v717 = vmul.f32 1.0, %v716
          %v718 = vrcp.pop %v612
          %v719 = vmul.f32 %v612, %v718
          %v720 = vsub.f32 1.0, %v719
          %v721 = vmul.f32 %v718, %v720
          %v722 = vadd.f32 %v718, %v721
          %vm723 = vweird.f32 %v612
          %vm724 = vweird.f32 %v718
          %vm725 = vmor %vm723, %vm724
          %v726 = vsel %vm725, %v718, %v722
          %v727 = vand.u32 2147483647, %v612
          %vm728 = vcmp.eq.f32.partialorder %v727, 8.507059e+37
          %v729 = vand.u32 %v612, 2147483648
          %v730 = vor.u32 1.1754944e-38, %v729
          %v731 = vsel %vm728, %v730, %v726
          %v732 = vmul.f32 1.0, %v731
          %733 = vst.msk [vmem:[%s209] sm:$0xff] %vm312, %v627
          %734 = vst.msk [vmem:[%s209 + $0x8] sm:$0xff] %vm312, %v642
          %735 = vst.msk [vmem:[%s209 + $0x10] sm:$0xff] %vm312, %v657
          %736 = vst.msk [vmem:[%s209 + $0x18] sm:$0xff] %vm312, %v672
          %737 = vst.msk [vmem:[%s209 + $0x20] sm:$0xff] %vm312, %v687
          %738 = vst.msk [vmem:[%s209 + $0x28] sm:$0xff] %vm312, %v702
          %739 = vst.msk [vmem:[%s209 + $0x30] sm:$0xff] %vm312, %v717
          %740 = vst.msk [vmem:[%s209 + $0x38] sm:$0xff] %vm312, %v732
        $region44: #{tpu_custom_call.1} parent=31 // pred_fallthru
          _
        %p741 = scmp.lt.s32.totalorder %s21, 1
        %s742 = scalar_select %p741, %s21, 1
        %s743 = smul.addr %s742, 8
        %s744 = smul.addr %s743, 8
        %s745 = scalar_lea.vmem %s3, %s744
        // Predicated region
        $region45: #{tpu_custom_call.1} parent=31 // pred_check
          %p746 = pneg %p117
        $region46: #{tpu_custom_call.1} parent=31 // pred_check_branch
          %748 = sbr.rel (%p746) target = $region48
        $region47: #{tpu_custom_call.1} parent=31 // pred_region
          _
        $region48: #{tpu_custom_call.1} parent=31 // pred_fallthru
          _
      $region32: #{tpu_custom_call.1} parent=5 // pred_fallthru
        _
      %p749 = scmp.le.s32.totalorder 2, %s12
      // Predicated region
      $region49: #{tpu_custom_call.1} parent=5 // pred_check
        %p750 = pneg %p749
      $region50: #{tpu_custom_call.1} parent=5 // pred_check_branch
        %752 = sbr.rel (%p750) target = $region52
      $region51: #{tpu_custom_call.1} parent=5 // pred_region
        %s753 = ssub.s32 %s12, 2
        // Predicated region
        $region53: #{tpu_custom_call.1} parent=51 // pred_check
          %p754 = pneg %p123
        $region54: #{tpu_custom_call.1} parent=51 // pred_check_branch
          %756 = sbr.rel (%p754) target = $region56
        $region55: #{tpu_custom_call.1} parent=51 // pred_region
          %p757 = scmp.lt.s32.totalorder %s23, 1
          %s758 = scalar_select %p757, %s23, 1
          %s759 = smul.addr %s758, 8
          %s760 = smul.addr %s759, 8
          %s761 = scalar_lea.vmem %s3, %s760
        $region56: #{tpu_custom_call.1} parent=51 // pred_fallthru
          _
      $region52: #{tpu_custom_call.1} parent=5 // pred_fallthru
        _
    $region6: #{tpu_custom_call.1} parent=1 // loop_footer
      %s16 = sadd.s32 1, %s12
    $region7: #{tpu_custom_call.1} parent=1 // loop_footer_branch
      %11 = sbr.rel target = $region3
    $region8: #{tpu_custom_call.1} parent=1 // loop_exit
      _
    %762 = vsyncpa [#allocation5], 1
    %s763 = scalar_lea.sflag [#allocation5], 1
    %764 = vsyncpa %s763, 1

</llo_original>
